<compile_context>
chip_gen: v7x
topology: tpu7x:2x2x1
jax: 0.10.0
libtpu: 0.0.40
codegen_flags: <defaults>
</compile_context>

<pallas_src>
import jax
import jax.numpy as jnp
from jax import lax
from jax.experimental import pallas as pl
from jax.experimental.pallas import tpu as pltpu


def _divisors(n):
    ds = set()
    for d in range(1, int(n ** 0.5) + 1):
        if n % d == 0:
            ds.add(d)
            ds.add(n // d)
    return sorted(ds)


def _pick_tile(n, target, multiple=8):
    """Tile size for extent n.

    Returns n itself when n <= target (a full-extent block is always
    layout-legal).  Otherwise returns the largest divisor of n that is
    <= target and a multiple of `multiple` (falling back to a multiple of 8,
    then to the full extent as a last resort).
    """
    if n <= target:
        return n
    divs = _divisors(n)
    for m in sorted({multiple, 8}, reverse=True):
        cands = [d for d in divs if d <= target and d % m == 0]
        if cands:
            return max(cands)
    # TODO(synk): cdiv grid + masked tail for prime/odd extents instead of
    # falling back to the (legal but possibly VMEM-heavy) full extent.
    return n


def _vmem_budgets():
    """(per-x-buffer target bytes, resident-weight budget bytes, vmem limit cap)."""
    try:
        cap = int(getattr(pltpu.get_tpu_info(), "vmem_capacity_bytes"))
    except Exception:
        cap = 64 * 1024 * 1024  # be conservative (v7x-class) if query fails
    if cap >= 100 * 1024 * 1024:
        # v5e / v6e: 128 MiB physical VMEM -> bigger tiles, fewer grid steps.
        return 20 * 1024 * 1024, 32 * 1024 * 1024, 100 * 1024 * 1024
    # v7x-class: 64 MiB physical VMEM.
    return 8 * 1024 * 1024, 20 * 1024 * 1024, 48 * 1024 * 1024


def avgpool_resampler(x, weight, bias):
    """x: (B, S, D_in); weight: (D_out, D_in) (PyTorch layout); bias: (D_out,)."""
    B, S, D_in = x.shape
    D_out = weight.shape[0]
    inv_s = 1.0 / float(S)

    x_itemsize = jnp.dtype(x.dtype).itemsize
    w_itemsize = jnp.dtype(weight.dtype).itemsize
    x_buf_target, w_budget, vmem_cap = _vmem_budgets()

    # Sub-32-bit dtypes pack rows along sublanes: align tiles accordingly.
    sub_mult = {4: 8, 2: 16, 1: 32}.get(x_itemsize, 8)

    # ---- joint tb / ts selection (ts must never collapse) -------------------
    TS_MIN = 32
    ts_min_eff = min(TS_MIN, S)
    row_bytes = D_in * x_itemsize                     # one (1, 1, D_in) row
    tb_cap = max(1, x_buf_target // max(1, ts_min_eff * row_bytes))
    tb_target = min(256, tb_cap)
    if B >= 16:
        # Keep >= 2 batch blocks so both v7x TensorCores get work
        # (negligible cost on single-TC v5e/v6e).
        tb_target = min(tb_target, B // 2)
    tb = _pick_tile(B, max(1, tb_target), multiple=sub_mult)

    ts_target = max(ts_min_eff, x_buf_target // max(1, tb * row_bytes))
    ts = _pick_tile(S, ts_target, multiple=sub_mult)

    # ---- optional D_out tiling (bound the resident weight, mainly for v7x) --
    tn = D_out
    if D_out * D_in * w_itemsize > w_budget and D_out % 128 == 0:
        tn_cap = max(128, w_budget // max(1, D_in * w_itemsize))
        cand = _pick_tile(D_out, tn_cap, multiple=128)
        if cand % 128 == 0:       # out/bias lane dim must be 128-aligned
            tn = cand

    nb, nj, nk = B // tb, D_out // tn, S // ts

    b2d = bias.reshape(1, D_out)  # metadata-only reshape (no HBM copy)
    w_dtype = weight.dtype

    def kernel(x_ref, w_ref, b_ref, o_ref, acc_ref):
        k = pl.program_id(2)

        @pl.when(k == 0)
        def _init():
            acc_ref[...] = jnp.zeros_like(acc_ref)

        # Hot path: f32 sum over this sequence chunk.  The upcast is fused
        # into the reduction (no (tb, ts, D_in) f32 temp); the 1/S mean scale
        # is applied once in the finalize branch.
        acc_ref[...] += jnp.sum(x_ref[...], axis=1, dtype=jnp.float32)

        @pl.when(k == pl.num_programs(2) - 1)
        def _finalize():
            pooled = acc_ref[...] * inv_s                       # (tb, D_in) mean, f32
            # Feed the MXU in the weight's native dtype (bf16 path on v6e/v7x);
            # f32 accumulation via preferred_element_type.  The (tn, D_in)
            # weight is contracted on its last dim -> no transpose needed.
            lhs = pooled if w_dtype == jnp.float32 else pooled.astype(w_dtype)
            y = lax.dot_general(
                lhs, w_ref[...],
                dimension_numbers=(((1,), (1,)), ((), ())),
                preferred_element_type=jnp.float32)             # (tb, tn)
            o_ref[...] = (y + b_ref[...].astype(jnp.float32)).astype(o_ref.dtype)

    # VMEM estimate: x double-buffered, weight/bias single-buffered, output
    # block double-buffered, f32 accumulator scratch.
    out_itemsize = x_itemsize
    est = (2 * tb * ts * D_in * x_itemsize
           + tn * D_in * w_itemsize
           + 2 * tb * tn * out_itemsize
           + 8 * max(128, tn) * w_itemsize
           + tb * D_in * 4)
    vmem_limit = int(min(max(2 * est, 16 * 1024 * 1024), vmem_cap))

    out2d = pl.pallas_call(
        kernel,
        out_shape=jax.ShapeDtypeStruct((B, D_out), x.dtype),
        grid_spec=pltpu.PrefetchScalarGridSpec(
            num_scalar_prefetch=0,
            grid=(nb, nj, nk),
            in_specs=[
                pl.BlockSpec((tb, ts, D_in), lambda b, j, k: (b, k, 0)),
                # Weight / bias never change along the streamed k axis; a
                # single buffer is enough (no double-buffer VMEM waste).
                pl.BlockSpec((tn, D_in), lambda b, j, k: (j, 0),
                             pipeline_mode=pl.Buffered(1)),
                pl.BlockSpec((1, tn), lambda b, j, k: (0, j),
                             pipeline_mode=pl.Buffered(1)),
            ],
            out_specs=pl.BlockSpec((tb, tn), lambda b, j, k: (b, j)),
            scratch_shapes=[pltpu.VMEM((tb, D_in), jnp.float32)],
        ),
        compiler_params=pltpu.CompilerParams(
            dimension_semantics=("parallel", "parallel", "arbitrary"),
            vmem_limit_bytes=vmem_limit,
        ),
    )(x, weight, b2d)

    return out2d.reshape(B, 1, D_out)


if __name__ == "__main__":
    B, S, D_in, D_out = 2, 8, 32, 16

    key = jax.random.PRNGKey(0)
    kx, kw, kb = jax.random.split(key, 3)

    x = jax.random.normal(kx, (B, S, D_in), dtype=jnp.float32)
    # Deterministic "Linear" params (PyTorch-style uniform +-1/sqrt(in_dim)).
    bound = 1.0 / (D_in ** 0.5)
    weight = jax.random.uniform(kw, (D_out, D_in), jnp.float32, -bound, bound)
    bias = jax.random.uniform(kb, (D_out,), jnp.float32, -bound, bound)

    out = avgpool_resampler(x, weight, bias)
    out = jax.block_until_ready(out)

    # Pure-JAX reference (same semantics as the PyTorch module).
    ref = jnp.mean(x, axis=1, keepdims=True) @ weight.T + bias
    assert out.shape == (B, 1, D_out)
    assert jnp.allclose(out, ref, atol=1e-5, rtol=1e-5), "mismatch vs reference"

    print("KERNEL_OK")
</pallas_src>

<mosaic_0001>
module attributes {stable_mosaic.version = 11 : i64} {
  func.func @kernel(%arg0: i32, %arg1: i32, %arg2: i32, %arg3: memref<2x8x32xf32, #tpu.memory_space<vmem>>, %arg4: memref<16x32xf32, #tpu.memory_space<vmem>>, %arg5: memref<1x16xf32, #tpu.memory_space<vmem>>, %arg6: memref<2x16xf32, #tpu.memory_space<vmem>>, %arg7: memref<2x32xf32, #tpu.memory_space<vmem>>) attributes {dimension_semantics = [#tpu.dimension_semantics<parallel>, #tpu.dimension_semantics<parallel>, #tpu.dimension_semantics<arbitrary>], iteration_bounds = array<i64: 1, 1, 1>, scalar_prefetch = 0 : i64, scratch_operands = 1 : i64, tpu.core_type = #tpu.core_type<tc>, window_params = [{transform_indices = @transform_0, window_bounds = array<i64: 2, 8, 32>}, {pipeline_mode = #tpu.pipeline_mode<synchronous>, transform_indices = @transform_1, window_bounds = array<i64: 16, 32>}, {pipeline_mode = #tpu.pipeline_mode<synchronous>, transform_indices = @transform_2, window_bounds = array<i64: 1, 16>}, {transform_indices = @transform_3, window_bounds = array<i64: 2, 16>}]} {
    %c0_i32 = arith.constant 0 : i32
    %0 = arith.cmpi eq, %arg2, %c0_i32 : i32
    %1 = arith.extui %0 : i1 to i32
    %c0_i32_0 = arith.constant 0 : i32
    %2 = arith.cmpi ne, %1, %c0_i32_0 : i32
    scf.if %2 {
      %cst_9 = arith.constant 0.000000e+00 : f32
      %11 = vector.broadcast %cst_9 : f32 to vector<2x32xf32>
      %c0_10 = arith.constant 0 : index
      %c0_11 = arith.constant 0 : index
      %12 = vector.load %arg7[%c0_10, %c0_11] : memref<2x32xf32, #tpu.memory_space<vmem>>, vector<2x32xf32>
      tpu.vector_store %arg7[%c0_10, %c0_11], %11 {strides = array<i32>} : memref<2x32xf32, #tpu.memory_space<vmem>>, vector<2x32xf32>,
    } else {
    }
    %c0 = arith.constant 0 : index
    %c0_1 = arith.constant 0 : index
    %3 = vector.load %arg7[%c0, %c0_1] : memref<2x32xf32, #tpu.memory_space<vmem>>, vector<2x32xf32>
    %c0_2 = arith.constant 0 : index
    %c0_3 = arith.constant 0 : index
    %c0_4 = arith.constant 0 : index
    %4 = vector.load %arg3[%c0_2, %c0_3, %c0_4] : memref<2x8x32xf32, #tpu.memory_space<vmem>>, vector<2x8x32xf32>
    %cst = arith.constant dense<0.000000e+00> : vector<2x32xf32>
    %5 = vector.multi_reduction <add>, %4, %cst [1] : vector<2x8x32xf32> to vector<2x32xf32>
    %6 = arith.addf %3, %5 : vector<2x32xf32>
    %c0_5 = arith.constant 0 : index
    %c0_6 = arith.constant 0 : index
    %7 = vector.load %arg7[%c0_5, %c0_6] : memref<2x32xf32, #tpu.memory_space<vmem>>, vector<2x32xf32>
    tpu.vector_store %arg7[%c0_5, %c0_6], %6 {strides = array<i32>} : memref<2x32xf32, #tpu.memory_space<vmem>>, vector<2x32xf32>,
    %c0_i32_7 = arith.constant 0 : i32
    %8 = arith.cmpi eq, %arg2, %c0_i32_7 : i32
    %9 = arith.extui %8 : i1 to i32
    %c0_i32_8 = arith.constant 0 : i32
    %10 = arith.cmpi ne, %9, %c0_i32_8 : i32
    scf.if %10 {
      %c0_9 = arith.constant 0 : index
      %c0_10 = arith.constant 0 : index
      %11 = vector.load %arg7[%c0_9, %c0_10] : memref<2x32xf32, #tpu.memory_space<vmem>>, vector<2x32xf32>
      %cst_11 = arith.constant 1.250000e-01 : f32
      %12 = vector.broadcast %cst_11 : f32 to vector<2x32xf32>
      %13 = arith.mulf %11, %12 : vector<2x32xf32>
      %c0_12 = arith.constant 0 : index
      %c0_13 = arith.constant 0 : index
      %14 = vector.load %arg4[%c0_12, %c0_13] : memref<16x32xf32, #tpu.memory_space<vmem>>, vector<16x32xf32>
      %cst_14 = arith.constant dense<0.000000e+00> : vector<2x16xf32>
      %15 = tpu.matmul %13, %14, %cst_14 {dimension_numbers = #tpu.dot_dimension_numbers<[1], [1], [0], [0], [0, 0, 1, 0], [], []>} : vector<2x32xf32>, vector<16x32xf32>, vector<2x16xf32> -> vector<2x16xf32>
      %c0_15 = arith.constant 0 : index
      %c0_16 = arith.constant 0 : index
      %16 = vector.load %arg5[%c0_15, %c0_16] : memref<1x16xf32, #tpu.memory_space<vmem>>, vector<1x16xf32>
      %17 = vector.broadcast %16 : vector<1x16xf32> to vector<2x16xf32>
      %18 = arith.addf %15, %17 : vector<2x16xf32>
      %c0_17 = arith.constant 0 : index
      %c0_18 = arith.constant 0 : index
      %19 = vector.load %arg6[%c0_17, %c0_18] : memref<2x16xf32, #tpu.memory_space<vmem>>, vector<2x16xf32>
      tpu.vector_store %arg6[%c0_17, %c0_18], %18 {strides = array<i32>} : memref<2x16xf32, #tpu.memory_space<vmem>>, vector<2x16xf32>,
    } else {
    }
    return
  }
  func.func @transform_0(%arg0: i32, %arg1: i32, %arg2: i32) -> (i32, i32, i32) {
    %c0_i32 = arith.constant 0 : i32
    %c0_i32_0 = arith.constant 0 : i32
    return %arg0, %arg2, %c0_i32 : i32, i32, i32
  }
  func.func @transform_1(%arg0: i32, %arg1: i32, %arg2: i32) -> (i32, i32) {
    %c0_i32 = arith.constant 0 : i32
    %c0_i32_0 = arith.constant 0 : i32
    return %arg1, %c0_i32 : i32, i32
  }
  func.func @transform_2(%arg0: i32, %arg1: i32, %arg2: i32) -> (i32, i32) {
    %c0_i32 = arith.constant 0 : i32
    %c0_i32_0 = arith.constant 0 : i32
    return %c0_i32, %arg1 : i32, i32
  }
  func.func @transform_3(%arg0: i32, %arg1: i32, %arg2: i32) -> (i32, i32) {
    %c0_i32 = arith.constant 0 : i32
    return %arg0, %arg1 : i32, i32
  }
}

</mosaic_0001>

<llo_original>
// kernel: tpu_custom_call.1
$region0: #{tpu_custom_call.1}
  #allocation0 [shape = 'u32[]', space=smem, size = 0x4, offset = 0x4, fixed_abs, tag = 'smem constant byte address 0x4 - core index']
  #allocation1 [shape = 'u32[144,128]{1,0:T(1,128)}', space=vmem, size = 0x12000, scoped, tag = 'internal scratch']
  #allocation2 [shape = 'f32[2,32]{1,0:T(2,128)}', space=vmem, size = 0x400, scoped, tag = 'scratch operand']
  %s0 = inlined_call_operand.hbm [shape: f32[2,8,32], index: 0, kind: input, shape index: {}]
  %s1 = inlined_call_operand.hbm [shape: f32[16,32], index: 1, kind: input, shape index: {}]
  %s2 = inlined_call_operand.vmem [shape: f32[1,16], index: 2, kind: input, shape index: {}]
  %s3 = inlined_call_operand.hbm [shape: f32[2,16], index: 3, kind: output, shape index: {}]
  %s4 = sld [smem:[#allocation0]]
  $region38: #{tpu_custom_call.1} parent=0
    _
  %s6 = ssub.s32 1, %s4
  %s7 = scalar_select 0, %s6, %s4
  $region1: #{tpu_custom_call.1} parent=0
    #allocation3 [shape = 'u8[8192]{0}', space=vmem, size = 0x2000, scoped, tag = 'input window, operand 0, single buffered']
    #allocation4 [shape = 's32[1]{0}', space=sflag, size = 0x4, scoped, tag = 'scoped memory for tpu_custom_call.1']
    #allocation5 [shape = 's32[1]{0}', space=sflag, size = 0x4, scoped, tag = 'scoped memory for tpu_custom_call.1']
    #allocation6 [shape = 'u8[8192]{0}', space=vmem, size = 0x2000, scoped, tag = 'input window, operand 1, single buffered']
    #allocation7 [shape = 's32[1]{0}', space=sflag, size = 0x4, scoped, tag = 'scoped memory for tpu_custom_call.1']
    #allocation8 [shape = 'u8[1024]{0}', space=vmem, size = 0x400, scoped, tag = 'output window, operand 0, single buffered']
    %8 = vsyncpa [#allocation4], 0
    %9 = vsyncpa [#allocation7], 0
    %10 = vsyncpa [#allocation5], 0
    // Predicated region
    $region2: #{tpu_custom_call.1} parent=1 // pred_check
      _
    $region3: #{tpu_custom_call.1} parent=1 // pred_check_branch
      %12 = sbr.rel (0) target = $region5
    $region4: #{tpu_custom_call.1} parent=1 // pred_region
      %s14 = ssub.s32 256, 256
      %15 = vsyncadd [#allocation4], %s14
      %s16 = sshll.u32 [#allocation3], 4
      %s17 = int_to_ptr.vmem [resolvable:$true] %s16
      %22 = dma.hbm_to_vmem [thread:$0]  %s0, 256, %s17, [#allocation4], 128, 128, 8
    $region5: #{tpu_custom_call.1} parent=1 // pred_fallthru
      _
    // Predicated region
    $region6: #{tpu_custom_call.1} parent=1 // pred_check
      _
    $region7: #{tpu_custom_call.1} parent=1 // pred_check_branch
      %24 = sbr.rel (0) target = $region9
    $region8: #{tpu_custom_call.1} parent=1 // pred_region
      %s26 = ssub.s32 256, 256
      %27 = vsyncadd [#allocation7], %s26
      %s28 = sshll.u32 [#allocation6], 4
      %s29 = int_to_ptr.vmem [resolvable:$true] %s28
      %34 = dma.hbm_to_vmem [thread:$0]  %s1, 256, %s29, [#allocation7], 128, 128, 8
    $region9: #{tpu_custom_call.1} parent=1 // pred_fallthru
      _
    // Predicated region
    $region10: #{tpu_custom_call.1} parent=1 // pred_check
      _
    $region11: #{tpu_custom_call.1} parent=1 // pred_check_branch
      %36 = sbr.rel (0) target = $region13
    $region12: #{tpu_custom_call.1} parent=1 // pred_region
      _
    $region13: #{tpu_custom_call.1} parent=1 // pred_fallthru
      _
    // Predicated region
    $region14: #{tpu_custom_call.1} parent=1 // pred_check
      _
    $region15: #{tpu_custom_call.1} parent=1 // pred_check_branch
      %38 = sbr.rel (0) target = $region17
    $region16: #{tpu_custom_call.1} parent=1 // pred_region
      %39 = dma.done [#allocation4], 256
    $region17: #{tpu_custom_call.1} parent=1 // pred_fallthru
      _
    // Predicated region
    $region18: #{tpu_custom_call.1} parent=1 // pred_check
      _
    $region19: #{tpu_custom_call.1} parent=1 // pred_check_branch
      %41 = sbr.rel (0) target = $region21
    $region20: #{tpu_custom_call.1} parent=1 // pred_region
      %42 = dma.done [#allocation7], 256
    $region21: #{tpu_custom_call.1} parent=1 // pred_fallthru
      _
    %p43 = scmp.eq.s32.totalorder 0, 0
    // Predicated region
    $region22: #{tpu_custom_call.1} parent=1 // pred_check
      %p44 = pneg %p43
    $region23: #{tpu_custom_call.1} parent=1 // pred_check_branch
      %46 = sbr.rel (%p44) target = $region25
    $region24: #{tpu_custom_call.1} parent=1 // pred_region
      %vm47 = vcmask 254976
      %48 = vst.msk [vmem:[#allocation2] sm:$0x3] %vm47, 0.0
    $region25: #{tpu_custom_call.1} parent=1 // pred_fallthru
      _
    %v49 = vld [vmem:[#allocation2] sm:$0x3]
    %v50 = vld [vmem:[#allocation3] sm:$0xff]
    %v51 = vld [vmem:[#allocation3 + $0x8] sm:$0xff]
    %vm52 = vcmask 261120
    %v53 = vsel %vm52, %v50, 0.0
    %v54 = vrot.slane %v53, 4
    %v55 = vadd.f32 %v53, %v54
    %v56 = vrot.slane %v55, 2
    %v57 = vadd.f32 %v55, %v56
    %v58 = vrot.slane %v57, 1
    %v59 = vadd.f32 %v57, %v58
    %v60 = vsel %vm52, %v51, 0.0
    %v61 = vrot.slane %v60, 4
    %v62 = vadd.f32 %v60, %v61
    %v63 = vrot.slane %v62, 2
    %v64 = vadd.f32 %v62, %v63
    %v65 = vrot.slane %v64, 1
    %v66 = vadd.f32 %v64, %v65
    %vm69 = vcmask 1041409
    %v70 = vsel %vm69, %v66, %v59
    %v72 = vadd.f32 %v49, %v70
    %vm73 = vcmask 254976
    %74 = vst.msk [vmem:[#allocation2] sm:$0x3] %vm73, %v72
    // Predicated region
    $region26: #{tpu_custom_call.1} parent=1 // pred_check
      %p75 = pneg %p43
    $region27: #{tpu_custom_call.1} parent=1 // pred_check_branch
      %77 = sbr.rel (%p75) target = $region29
    $region28: #{tpu_custom_call.1} parent=1 // pred_region
      %v78 = vld [vmem:[#allocation2] sm:$0x3]
      %v79 = vmul.f32 %v78, 0.125
      %v80 = vld [vmem:[#allocation6] sm:$0xff]
      %v81 = vld [vmem:[#allocation6 + $0x8] sm:$0xff]
      %v82 = vld [vmem:[%s2] sm:$0x1]
      %v84 = vlaneseq
      %v85 = vshrl.u32 %v84, 7
      %v86 = vsub.s32 0, %v85
      %v87 = vrot.slane %v82, %v86
      %v90 = vsel %vm52, %v79, 0
      %v93 = vsel %vm52, %v80, 0
      %v96 = vsel %vm52, %v81, 0
      %98 = vmatprep.subr.mxu0 0.0
      %99 = vmatpush1.xpose.msra.mxu0 %v93
      %100 = vmatprep.subr.mxu0 0.0
      %101 = vmatpush1.xpose.msra.mxu0 %v96
      %102 = vmatprep.subr.mxu0 0.0
      %103 = vmatpush1.xpose.msra.mxu0 0.0
      %104 = vmatprep.subr.mxu0 0.0
      %105 = vmatpush1.xpose.msra.mxu0 0.0
      %106 = vmatprep.subr.mxu0 0.0
      %107 = vmatpush1.xpose.msra.mxu0 0.0
      %108 = vmatprep.subr.mxu0 0.0
      %109 = vmatpush1.xpose.msra.mxu0 0.0
      %110 = vmatprep.subr.mxu0 0.0
      %111 = vmatpush1.xpose.msra.mxu0 0.0
      %112 = vmatprep.subr.mxu0 0.0
      %113 = vmatpush1.xpose.msra.mxu0 0.0
      %114 = vmatprep.subr.mxu0 0.0
      %115 = vmatpush1.xpose.msra.mxu0 0.0
      %116 = vmatprep.subr.mxu0 0.0
      %117 = vmatpush1.xpose.msra.mxu0 0.0
      %118 = vmatprep.subr.mxu0 0.0
      %119 = vmatpush1.xpose.msra.mxu0 0.0
      %120 = vmatprep.subr.mxu0 0.0
      %121 = vmatpush1.xpose.msra.mxu0 0.0
      %122 = vmatprep.subr.mxu0 0.0
      %123 = vmatpush1.xpose.msra.mxu0 0.0
      %124 = vmatprep.subr.mxu0 0.0
      %125 = vmatpush1.xpose.msra.mxu0 0.0
      %126 = vmatprep.subr.mxu0 0.0
      %127 = vmatpush1.xpose.msra.mxu0 0.0
      %128 = vmatprep.subr.mxu0 0.0
      %129 = vmatpush1.xpose.msra.mxu0 0.0
      %130 = vmatprep.subr.mxu0 0.0
      %131 = vmatpush1.xpose.msra.mxu0 0.0
      %132 = vmatprep.subr.mxu0 0.0
      %133 = vmatpush1.xpose.msra.mxu0 0.0
      %134 = vmatprep.subr.mxu0 0.0
      %135 = vmatpush1.xpose.msra.mxu0 0.0
      %136 = vmatprep.subr.mxu0 0.0
      %137 = vmatpush1.xpose.msra.mxu0 0.0
      %138 = vmatprep.subr.mxu0 0.0
      %139 = vmatpush1.xpose.msra.mxu0 0.0
      %140 = vmatprep.subr.mxu0 0.0
      %141 = vmatpush1.xpose.msra.mxu0 0.0
      %142 = vmatprep.subr.mxu0 0.0
      %143 = vmatpush1.xpose.msra.mxu0 0.0
      %144 = vmatprep.subr.mxu0 0.0
      %145 = vmatpush1.xpose.msra.mxu0 0.0
      %146 = vmatprep.subr.mxu0 0.0
      %147 = vmatpush1.xpose.msra.mxu0 0.0
      %148 = vmatprep.subr.mxu0 0.0
      %149 = vmatpush1.xpose.msra.mxu0 0.0
      %150 = vmatprep.subr.mxu0 0.0
      %151 = vmatpush1.xpose.msra.mxu0 0.0
      %152 = vmatprep.subr.mxu0 0.0
      %153 = vmatpush1.xpose.msra.mxu0 0.0
      %154 = vmatprep.subr.mxu0 0.0
      %155 = vmatpush1.xpose.msra.mxu0 0.0
      %156 = vmatprep.subr.mxu0 0.0
      %157 = vmatpush1.xpose.msra.mxu0 0.0
      %158 = vmatprep.subr.mxu0 0.0
      %159 = vmatpush1.xpose.msra.mxu0 0.0
      %160 = vmatprep.subr.mxu0 0.0
      %161 = vmatpush1.xpose.msra.mxu0 0.0
      %162 = vmatprep.mubr.f32.mxu0 0.0
      %163 = vmatmul.mubr.f32.gmra.mrb[0].mxu0 %v90
      %v164 = vpop.f32.mrb[0].mxu0
      %v165 = vadd.f32 %v87, %v164
      %v166 = vpop.f32.mrb[0].mxu0
      %167 = vdwg.mxu0
      %vm168 = vcmask 123904
      %169 = vst.msk [vmem:[#allocation8] sm:$0x3] %vm168, %v165
    $region29: #{tpu_custom_call.1} parent=1 // pred_fallthru
      _
    // Predicated region
    $region30: #{tpu_custom_call.1} parent=1 // pred_check
      _
    $region31: #{tpu_custom_call.1} parent=1 // pred_check_branch
      %171 = sbr.rel (0) target = $region33
    $region32: #{tpu_custom_call.1} parent=1 // pred_region
      %s173 = ssub.s32 32, 32
      %174 = vsyncadd [#allocation5], %s173
      %s176 = sshll.u32 [#allocation8], 4
      %s177 = int_to_ptr.vmem [resolvable:$true] %s176
      %179 = dma.vmem_to_hbm [thread:$0]  %s177, 32, %s3, [#allocation5]
    $region33: #{tpu_custom_call.1} parent=1 // pred_fallthru
      _
    // Predicated region
    $region34: #{tpu_custom_call.1} parent=1 // pred_check
      _
    $region35: #{tpu_custom_call.1} parent=1 // pred_check_branch
      %181 = sbr.rel (0) target = $region37
    $region36: #{tpu_custom_call.1} parent=1 // pred_region
      %182 = dma.done [#allocation5], 32
    $region37: #{tpu_custom_call.1} parent=1 // pred_fallthru
      _
    %183 = vsyncpa [#allocation4], 1
    %184 = vsyncpa [#allocation7], 1
    %185 = vsyncpa [#allocation5], 1

</llo_original>
